<compile_context>
chip_gen: v7x
topology: tpu7x:2x2x1
jax: 0.10.0
libtpu: 0.0.40
codegen_flags: <defaults>
</compile_context>

<pallas_src>
import functools

import jax
import jax.numpy as jnp
from jax.experimental import pallas as pl
from jax.experimental.pallas import tpu as pltpu


# ---------------------------------------------------------------------------
# Kernel 1: per-vocab-row score table for the selected label.
#   score_table[v] = emb_table[v, :] . w_col        (bf16 in, f32 accumulate)
# ---------------------------------------------------------------------------
def _score_table_kernel(emb_ref, w_ref, out_ref):
    # emb_ref: (TV, H) bf16   tile of the embedding table
    # w_ref:   (H, 1)  bf16   selected classifier column
    # out_ref: (TV, 1) f32    per-vocab-row score
    out_ref[...] = jnp.dot(emb_ref[...], w_ref[...],
                           preferred_element_type=jnp.float32)


# ---------------------------------------------------------------------------
# Kernel 2: masked mean pool of per-token scores + bias + sigmoid.
# Batch lives on the LANE axis: inputs (S, TB), output (1, TB) -> lane-dense
# loads/stores, full 128-lane VPU utilization, no trailing size-1 dims.
# ---------------------------------------------------------------------------
def _pool_sigmoid_kernel(scores_ref, mask_ref, b_ref, out_ref):
    # scores_ref: (S, TB) f32  gathered per-token scores for this batch tile
    # mask_ref:   (S, TB) f32  attention mask
    # b_ref:      (1, 1)  f32  selected classifier bias (SMEM)
    # out_ref:    (1, TB) f32  sigmoid(logit) for the selected label
    scores = scores_ref[...]
    mask = mask_ref[...]
    wsum = jnp.sum(scores * mask, axis=0, keepdims=True)                 # (1, TB)
    denom = jnp.maximum(jnp.sum(mask, axis=0, keepdims=True), 1.0)       # (1, TB)
    logits = wsum / denom + b_ref[0, 0]
    out_ref[...] = jax.nn.sigmoid(logits)


def one_label_forward(input_ids, attention_mask, emb_table_bf16, w_bf16, b,
                      selected_index, *, batch_tile=128, vocab_tile=256):
    """Equivalent of OneLabelModel.forward for the synthetic inner model.

    emb_table_bf16 / w_bf16 are expected already in bf16 (cast once at init,
    outside the jitted per-call path).
    """
    assert batch_tile % 128 == 0, "batch_tile must be a multiple of the lane width"
    assert vocab_tile % 8 == 0, "vocab_tile must be a multiple of the sublane width"

    # .clone().detach().long() semantics -> integer dtypes (values copy anyway in JAX)
    input_ids = input_ids.astype(jnp.int32)
    attention_mask = attention_mask.astype(jnp.int32)

    B, S = input_ids.shape
    V, H = emb_table_bf16.shape

    # Selected classifier column / bias (static slice, C x less work than full head).
    w_col = w_bf16[:, selected_index:selected_index + 1]                     # (H, 1) bf16
    b_sel = b[:, selected_index:selected_index + 1].astype(jnp.float32)      # (1, 1) f32

    # ---------------- Stage 1: score table (V_pad, 1) ----------------
    # NOTE: for a production vocab, pre-pad the table once at init instead of
    # paying this pad-copy per call.
    V_pad = int(pl.cdiv(V, vocab_tile)) * vocab_tile
    emb_pad = emb_table_bf16
    if V_pad != V:
        emb_pad = jnp.pad(emb_table_bf16, ((0, V_pad - V), (0, 0)))

    score_table = pl.pallas_call(
        _score_table_kernel,
        out_shape=jax.ShapeDtypeStruct((V_pad, 1), jnp.float32),
        grid_spec=pltpu.PrefetchScalarGridSpec(
            num_scalar_prefetch=0,
            grid=(V_pad // vocab_tile,),
            in_specs=[
                pl.BlockSpec((vocab_tile, H), lambda i: (i, 0)),   # emb tile (bf16)
                pl.BlockSpec((H, 1), lambda i: (0, 0)),            # classifier column
            ],
            out_specs=pl.BlockSpec((vocab_tile, 1), lambda i: (i, 0)),
        ),
        compiler_params=pltpu.CompilerParams(
            dimension_semantics=("parallel",),
            vmem_limit_bytes=32 * 1024 * 1024,
        ),
        cost_estimate=pl.CostEstimate(
            flops=2 * V_pad * H,
            transcendentals=0,
            bytes_accessed=V_pad * H * 2 + H * 2 + V_pad * 4,
        ),
    )(emb_pad, w_col)[:, 0]                                        # (V_pad,) f32

    # ---------------- Stage 2: gather + pool + sigmoid ----------------
    B_pad = int(pl.cdiv(B, batch_tile)) * batch_tile
    if B_pad != B:
        pad = B_pad - B
        input_ids = jnp.pad(input_ids, ((0, pad), (0, 0)))         # padded ids -> 0 (< V)
        attention_mask = jnp.pad(attention_mask, ((0, pad), (0, 0)))  # padded mask -> 0

    # Tiny gather: only B_pad*S*4 bytes move (vs. B*S*H*2 for full embeddings).
    scores_t = jnp.take(score_table, input_ids.T, axis=0)          # (S, B_pad) f32
    mask_t = attention_mask.T.astype(jnp.float32)                  # (S, B_pad) f32

    out = pl.pallas_call(
        _pool_sigmoid_kernel,
        out_shape=jax.ShapeDtypeStruct((1, B_pad), jnp.float32),
        grid_spec=pltpu.PrefetchScalarGridSpec(
            num_scalar_prefetch=0,
            grid=(B_pad // batch_tile,),
            in_specs=[
                pl.BlockSpec((S, batch_tile), lambda i: (0, i)),   # per-token scores
                pl.BlockSpec((S, batch_tile), lambda i: (0, i)),   # attention mask
                pl.BlockSpec(memory_space=pltpu.MemorySpace.SMEM), # bias scalar
            ],
            out_specs=pl.BlockSpec((1, batch_tile), lambda i: (0, i)),
        ),
        compiler_params=pltpu.CompilerParams(
            dimension_semantics=("parallel",),   # batch tiles independent (megacore)
            vmem_limit_bytes=32 * 1024 * 1024,
        ),
        cost_estimate=pl.CostEstimate(
            flops=4 * B_pad * S,
            transcendentals=B_pad,
            bytes_accessed=2 * B_pad * S * 4 + B_pad * 4 + 4,
        ),
    )(scores_t, mask_t, b_sel)

    # torch's sigmoid(preds)[:, idx] returns shape (B,); padded rows dropped.
    return out[0, :B]


if __name__ == "__main__":
    # Small, deterministic synthetic configuration.
    B, S, H, C, V = 2, 8, 32, 8, 100
    selected_index = 3

    key = jax.random.PRNGKey(0)
    k_ids, k_emb, k_w, k_b = jax.random.split(key, 4)

    input_ids = jax.random.randint(k_ids, (B, S), 0, V, dtype=jnp.int32)
    # first few tokens valid, rest padded (deterministic mask pattern)
    lens = jnp.array([S, S // 2], dtype=jnp.int32)
    attention_mask = (jnp.arange(S)[None, :] < lens[:, None]).astype(jnp.int32)

    emb_table = jax.random.normal(k_emb, (V, H), dtype=jnp.float32) * 0.05
    w = jax.random.normal(k_w, (H, C), dtype=jnp.float32) * 0.1
    b = jax.random.normal(k_b, (1, C), dtype=jnp.float32) * 0.01

    # Cast model parameters to bf16 ONCE at init, outside the jitted path.
    emb_table_bf16 = emb_table.astype(jnp.bfloat16)
    w_bf16 = w.astype(jnp.bfloat16)

    fwd = jax.jit(functools.partial(one_label_forward,
                                    selected_index=selected_index))
    out = fwd(input_ids, attention_mask, emb_table_bf16, w_bf16, b)
    jax.block_until_ready(out)

    # Pure-JAX reference (same bf16-quantized embedding table / classifier, f32 math).
    emb_q = emb_table_bf16.astype(jnp.float32)
    w_q = w_bf16.astype(jnp.float32)
    emb_ref = jnp.take(emb_q, input_ids, axis=0)
    m = attention_mask.astype(jnp.float32)
    pooled_ref = (emb_ref * m[:, :, None]).sum(1) / jnp.maximum(
        m.sum(1, keepdims=True), 1.0)
    ref = jax.nn.sigmoid(pooled_ref @ w_q + b)[:, selected_index]

    assert out.shape == (B,), out.shape
    assert jnp.allclose(out, ref, atol=1e-3), (out, ref)

    print("KERNEL_OK")
</pallas_src>

<mosaic_0001>
module attributes {stable_mosaic.version = 11 : i64} {
  func.func @_score_table_kernel(%arg0: i32, %arg1: memref<256x32xbf16, #tpu.memory_space<vmem>>, %arg2: memref<32x1xbf16, #tpu.memory_space<vmem>>, %arg3: memref<256x1xf32, #tpu.memory_space<vmem>>) attributes {dimension_semantics = [#tpu.dimension_semantics<parallel>], iteration_bounds = array<i64: 1>, scalar_prefetch = 0 : i64, scratch_operands = 0 : i64, tpu.core_type = #tpu.core_type<tc>, window_params = [{transform_indices = @transform_0, window_bounds = array<i64: 256, 32>}, {pipeline_mode = #tpu.pipeline_mode<synchronous>, transform_indices = @transform_1, window_bounds = array<i64: 32, 1>}, {transform_indices = @transform_2, window_bounds = array<i64: 256, 1>}]} {
    %c0 = arith.constant 0 : index
    %c0_0 = arith.constant 0 : index
    %0 = vector.load %arg1[%c0, %c0_0] : memref<256x32xbf16, #tpu.memory_space<vmem>>, vector<256x32xbf16>
    %c0_1 = arith.constant 0 : index
    %c0_2 = arith.constant 0 : index
    %1 = vector.load %arg2[%c0_1, %c0_2] : memref<32x1xbf16, #tpu.memory_space<vmem>>, vector<32x1xbf16>
    %cst = arith.constant dense<0.000000e+00> : vector<256x1xf32>
    %2 = tpu.matmul %0, %1, %cst {dimension_numbers = #tpu.dot_dimension_numbers<[1], [0], [0], [1], [0, 0, 1, 1], [], []>} : vector<256x32xbf16>, vector<32x1xbf16>, vector<256x1xf32> -> vector<256x1xf32>
    %c0_3 = arith.constant 0 : index
    %c0_4 = arith.constant 0 : index
    %3 = vector.load %arg3[%c0_3, %c0_4] : memref<256x1xf32, #tpu.memory_space<vmem>>, vector<256x1xf32>
    tpu.vector_store %arg3[%c0_3, %c0_4], %2 {strides = array<i32>} : memref<256x1xf32, #tpu.memory_space<vmem>>, vector<256x1xf32>,
    return
  }
  func.func @transform_0(%arg0: i32) -> (i32, i32) {
    %c0_i32 = arith.constant 0 : i32
    %c0_i32_0 = arith.constant 0 : i32
    return %arg0, %c0_i32 : i32, i32
  }
  func.func @transform_1(%arg0: i32) -> (i32, i32) {
    %c0_i32 = arith.constant 0 : i32
    %c0_i32_0 = arith.constant 0 : i32
    %c0_i32_1 = arith.constant 0 : i32
    return %c0_i32, %c0_i32_0 : i32, i32
  }
  func.func @transform_2(%arg0: i32) -> (i32, i32) {
    %c0_i32 = arith.constant 0 : i32
    %c0_i32_0 = arith.constant 0 : i32
    return %arg0, %c0_i32 : i32, i32
  }
}

module attributes {stable_mosaic.version = 11 : i64} {
  func.func @_pool_sigmoid_kernel(%arg0: i32, %arg1: memref<8x128xf32, #tpu.memory_space<vmem>>, %arg2: memref<8x128xf32, #tpu.memory_space<vmem>>, %arg3: memref<1x1xf32, #tpu.memory_space<smem>>, %arg4: memref<1x128xf32, #tpu.memory_space<vmem>>) attributes {dimension_semantics = [#tpu.dimension_semantics<parallel>], iteration_bounds = array<i64: 1>, scalar_prefetch = 0 : i64, scratch_operands = 0 : i64, tpu.core_type = #tpu.core_type<tc>, window_params = [{transform_indices = @transform_0, window_bounds = array<i64: 8, 128>}, {transform_indices = @transform_1, window_bounds = array<i64: 8, 128>}, {transform_indices = @transform_2, window_bounds = array<i64: 1, 1>}, {transform_indices = @transform_3, window_bounds = array<i64: 1, 128>}]} {
    %c0 = arith.constant 0 : index
    %c0_0 = arith.constant 0 : index
    %0 = vector.load %arg1[%c0, %c0_0] : memref<8x128xf32, #tpu.memory_space<vmem>>, vector<8x128xf32>
    %c0_1 = arith.constant 0 : index
    %c0_2 = arith.constant 0 : index
    %1 = vector.load %arg2[%c0_1, %c0_2] : memref<8x128xf32, #tpu.memory_space<vmem>>, vector<8x128xf32>
    %2 = arith.mulf %0, %1 : vector<8x128xf32>
    %cst = arith.constant dense<0.000000e+00> : vector<128xf32>
    %3 = vector.multi_reduction <add>, %2, %cst [0] : vector<8x128xf32> to vector<128xf32>
    %4 = vector.shape_cast %3 : vector<128xf32> to vector<1x128xf32>
    %cst_3 = arith.constant dense<0.000000e+00> : vector<128xf32>
    %5 = vector.multi_reduction <add>, %1, %cst_3 [0] : vector<8x128xf32> to vector<128xf32>
    %6 = vector.shape_cast %5 : vector<128xf32> to vector<1x128xf32>
    %cst_4 = arith.constant 1.000000e+00 : f32
    %7 = vector.broadcast %cst_4 : f32 to vector<1x128xf32>
    %8 = arith.maximumf %6, %7 : vector<1x128xf32>
    %9 = arith.divf %4, %8 : vector<1x128xf32>
    %c0_5 = arith.constant 0 : index
    %c0_6 = arith.constant 0 : index
    %10 = memref.load %arg3[%c0_5, %c0_6] : memref<1x1xf32, #tpu.memory_space<smem>>
    %11 = vector.broadcast %10 : f32 to vector<1x128xf32>
    %12 = arith.addf %9, %11 : vector<1x128xf32>
    %13 = arith.negf %12 : vector<1x128xf32>
    %14 = math.exp %13 : vector<1x128xf32>
    %cst_7 = arith.constant 1.000000e+00 : f32
    %15 = vector.broadcast %cst_7 : f32 to vector<1x128xf32>
    %16 = arith.addf %15, %14 : vector<1x128xf32>
    %17 = arith.divf %15, %16 : vector<1x128xf32>
    %c0_8 = arith.constant 0 : index
    %c0_9 = arith.constant 0 : index
    %18 = vector.load %arg4[%c0_8, %c0_9] : memref<1x128xf32, #tpu.memory_space<vmem>>, vector<1x128xf32>
    tpu.vector_store %arg4[%c0_8, %c0_9], %17 {strides = array<i32>} : memref<1x128xf32, #tpu.memory_space<vmem>>, vector<1x128xf32>,
    return
  }
  func.func @transform_0(%arg0: i32) -> (i32, i32) {
    %c0_i32 = arith.constant 0 : i32
    %c0_i32_0 = arith.constant 0 : i32
    return %c0_i32, %arg0 : i32, i32
  }
  func.func @transform_1(%arg0: i32) -> (i32, i32) {
    %c0_i32 = arith.constant 0 : i32
    %c0_i32_0 = arith.constant 0 : i32
    return %c0_i32, %arg0 : i32, i32
  }
  func.func @transform_2(%arg0: i32) -> (i32, i32) {
    %c0_i32 = arith.constant 0 : i32
    %c0_i32_0 = arith.constant 0 : i32
    %c0_i32_1 = arith.constant 0 : i32
    return %c0_i32, %c0_i32_0 : i32, i32
  }
  func.func @transform_3(%arg0: i32) -> (i32, i32) {
    %c0_i32 = arith.constant 0 : i32
    %c0_i32_0 = arith.constant 0 : i32
    return %c0_i32, %arg0 : i32, i32
  }
}

</mosaic_0001>

<llo_original>
// kernel: one_label_forward.3
$region0: #{one_label_forward.3}
  #allocation0 [shape = 'u32[]', space=smem, size = 0x4, offset = 0x4, fixed_abs, tag = 'smem constant byte address 0x4 - core index']
  #allocation1 [shape = 'u32[144,128]{1,0:T(1,128)}', space=vmem, size = 0x12000, scoped, tag = 'internal scratch']
  #allocation2 [shape = 'f32[1,1]{1,0:T(1,128)S(6)}', space=smem, size = 0x200, scoped, tag = 'scoped memory for one_label_forward.3']
  %s0 = inlined_call_operand.vmem [shape: f32[8,128], index: 0, kind: input, shape index: {}]
  %s1 = inlined_call_operand.vmem [shape: f32[8,128], index: 1, kind: input, shape index: {}]
  %s2 = inlined_call_operand.<no memory space> [shape: f32[1,1], index: 2, kind: input, shape index: {}]
  %s3 = inlined_call_operand.vmem [shape: f32[1,128], index: 3, kind: output, shape index: {}]
  %s4 = sld [smem:[#allocation0]]
  $region22: #{one_label_forward.3} parent=0
    _
  %s6 = ssub.s32 1, %s4
  %s7 = scalar_select 0, %s6, %s4
  %8 = sst [smem:[#allocation2]] %s2
  // Predicated region
  $region2: #{one_label_forward.3} parent=0 // pred_check
    _
  $region3: #{one_label_forward.3} parent=0 // pred_check_branch
    %10 = sbr.rel (0) target = $region5
  $region4: #{one_label_forward.3} parent=0 // pred_region
    _
  $region5: #{one_label_forward.3} parent=0 // pred_fallthru
    _
  // Predicated region
  $region6: #{one_label_forward.3} parent=0 // pred_check
    _
  $region7: #{one_label_forward.3} parent=0 // pred_check_branch
    %12 = sbr.rel (0) target = $region9
  $region8: #{one_label_forward.3} parent=0 // pred_region
    _
  $region9: #{one_label_forward.3} parent=0 // pred_fallthru
    _
  // Predicated region
  $region10: #{one_label_forward.3} parent=0 // pred_check
    _
  $region11: #{one_label_forward.3} parent=0 // pred_check_branch
    %14 = sbr.rel (0) target = $region13
  $region12: #{one_label_forward.3} parent=0 // pred_region
    _
  $region13: #{one_label_forward.3} parent=0 // pred_fallthru
    _
  %v15 = vld [vmem:[%s0] sm:$0xff]
  %v16 = vld [vmem:[%s1] sm:$0xff]
  %v17 = vmul.f32 %v15, %v16
  %v18 = vrot.slane %v17, 4
  %v19 = vadd.f32 %v17, %v18
  %v20 = vrot.slane %v19, 2
  %v21 = vadd.f32 %v19, %v20
  %v22 = vrot.slane %v21, 1
  %v23 = vadd.f32 %v21, %v22
  %v24 = vrot.slane %v16, 4
  %v25 = vadd.f32 %v16, %v24
  %v26 = vrot.slane %v25, 2
  %v27 = vadd.f32 %v25, %v26
  %v28 = vrot.slane %v27, 1
  %v29 = vadd.f32 %v27, %v28
  %v30 = vmax.f32 %v29, 1.0
  %v31 = vrcp.pop %v30
  %v32 = vmul.f32 %v23, %v31
  %s33 = sld [smem:[#allocation2]]
  %v34 = vstv %s33
  %v35 = vadd.f32 %v32, %v34
  %v36 = vxor.u32 %v35, 2147483648
  %v37 = vmul.f32 %v36, 1.442695
  %v38 = vpow.pop %v37
  %v39 = vadd.f32 %v38, 1.0
  %v40 = vrcp.pop %v39
  %v41 = vmul.f32 1.0, %v40
  %42 = vst [vmem:[%s3] sm:$0x1] %v41
  // Predicated region
  $region14: #{one_label_forward.3} parent=0 // pred_check
    _
  $region15: #{one_label_forward.3} parent=0 // pred_check_branch
    %44 = sbr.rel (0) target = $region17
  $region16: #{one_label_forward.3} parent=0 // pred_region
    _
  $region17: #{one_label_forward.3} parent=0 // pred_fallthru
    _
  // Predicated region
  $region18: #{one_label_forward.3} parent=0 // pred_check
    _
  $region19: #{one_label_forward.3} parent=0 // pred_check_branch
    %46 = sbr.rel (0) target = $region21
  $region20: #{one_label_forward.3} parent=0 // pred_region
    _
  $region21: #{one_label_forward.3} parent=0 // pred_fallthru
    _

// kernel: one_label_forward.2
$region0: #{one_label_forward.2}
  #allocation0 [shape = 'u32[]', space=smem, size = 0x4, offset = 0x4, fixed_abs, tag = 'smem constant byte address 0x4 - core index']
  #allocation1 [shape = 'u32[144,128]{1,0:T(1,128)}', space=vmem, size = 0x12000, scoped, tag = 'internal scratch']
  %s0 = inlined_call_operand.vmem [shape: bf16[256,32], index: 0, kind: input, shape index: {}]
  %s1 = inlined_call_operand.vmem [shape: bf16[32,1], index: 1, kind: input, shape index: {}]
  %s2 = inlined_call_operand.vmem [shape: f32[256,1], index: 2, kind: output, shape index: {}]
  %s3 = sld [smem:[#allocation0]]
  $region18: #{one_label_forward.2} parent=0
    _
  %s5 = ssub.s32 1, %s3
  %s6 = scalar_select 0, %s5, %s3
  // Predicated region
  $region2: #{one_label_forward.2} parent=0 // pred_check
    _
  $region3: #{one_label_forward.2} parent=0 // pred_check_branch
    %8 = sbr.rel (0) target = $region5
  $region4: #{one_label_forward.2} parent=0 // pred_region
    _
  $region5: #{one_label_forward.2} parent=0 // pred_fallthru
    _
  // Predicated region
  $region6: #{one_label_forward.2} parent=0 // pred_check
    _
  $region7: #{one_label_forward.2} parent=0 // pred_check_branch
    %10 = sbr.rel (0) target = $region9
  $region8: #{one_label_forward.2} parent=0 // pred_region
    _
  $region9: #{one_label_forward.2} parent=0 // pred_fallthru
    _
  %v12 = vld [vmem:[%s0] sm:$0xf]
  %v13 = vld [vmem:[%s0 + $0x4] sm:$0xf]
  %v14 = vld [vmem:[%s0 + $0x8] sm:$0xf]
  %v15 = vld [vmem:[%s0 + $0xc] sm:$0xf]
  %v16 = vld [vmem:[%s0 + $0x10] sm:$0xf]
  %v17 = vld [vmem:[%s0 + $0x14] sm:$0xf]
  %v18 = vld [vmem:[%s0 + $0x18] sm:$0xf]
  %v19 = vld [vmem:[%s0 + $0x1c] sm:$0xf]
  %v20 = vld [vmem:[%s0 + $0x20] sm:$0xf]
  %v21 = vld [vmem:[%s0 + $0x24] sm:$0xf]
  %v22 = vld [vmem:[%s0 + $0x28] sm:$0xf]
  %v23 = vld [vmem:[%s0 + $0x2c] sm:$0xf]
  %v24 = vld [vmem:[%s0 + $0x30] sm:$0xf]
  %v25 = vld [vmem:[%s0 + $0x34] sm:$0xf]
  %v26 = vld [vmem:[%s0 + $0x38] sm:$0xf]
  %v27 = vld [vmem:[%s0 + $0x3c] sm:$0xf]
  %v28 = vld [vmem:[%s0 + $0x40] sm:$0xf]
  %v29 = vld [vmem:[%s0 + $0x44] sm:$0xf]
  %v30 = vld [vmem:[%s0 + $0x48] sm:$0xf]
  %v31 = vld [vmem:[%s0 + $0x4c] sm:$0xf]
  %v32 = vld [vmem:[%s0 + $0x50] sm:$0xf]
  %v33 = vld [vmem:[%s0 + $0x54] sm:$0xf]
  %v34 = vld [vmem:[%s0 + $0x58] sm:$0xf]
  %v35 = vld [vmem:[%s0 + $0x5c] sm:$0xf]
  %v36 = vld [vmem:[%s0 + $0x60] sm:$0xf]
  %v37 = vld [vmem:[%s0 + $0x64] sm:$0xf]
  %v38 = vld [vmem:[%s0 + $0x68] sm:$0xf]
  %v39 = vld [vmem:[%s0 + $0x6c] sm:$0xf]
  %v40 = vld [vmem:[%s0 + $0x70] sm:$0xf]
  %v41 = vld [vmem:[%s0 + $0x74] sm:$0xf]
  %v42 = vld [vmem:[%s0 + $0x78] sm:$0xf]
  %v43 = vld [vmem:[%s0 + $0x7c] sm:$0xf]
  %v44 = vld [vmem:[%s1] sm:$0xf]
  %v45 = vld [vmem:[%s1 + $0x4] sm:$0xf]
  %v46 = vld [vmem:[%s1 + $0x8] sm:$0xf]
  %v47 = vld [vmem:[%s1 + $0xc] sm:$0xf]
  %v80 = vunpack.c.l.b16 %v12
  %v81 = vunpack.c.l.b16 %v13
  %v82 = vunpack.c.l.b16 %v14
  %v83 = vunpack.c.l.b16 %v15
  %v84 = vunpack.c.l.b16 %v16
  %v85 = vunpack.c.l.b16 %v17
  %v86 = vunpack.c.l.b16 %v18
  %v87 = vunpack.c.l.b16 %v19
  %v88 = vunpack.c.l.b16 %v20
  %v89 = vunpack.c.l.b16 %v21
  %v90 = vunpack.c.l.b16 %v22
  %v91 = vunpack.c.l.b16 %v23
  %v92 = vunpack.c.l.b16 %v24
  %v93 = vunpack.c.l.b16 %v25
  %v94 = vunpack.c.l.b16 %v26
  %v95 = vunpack.c.l.b16 %v27
  %v96 = vunpack.c.l.b16 %v28
  %v97 = vunpack.c.l.b16 %v29
  %v98 = vunpack.c.l.b16 %v30
  %v99 = vunpack.c.l.b16 %v31
  %v100 = vunpack.c.l.b16 %v32
  %v101 = vunpack.c.l.b16 %v33
  %v102 = vunpack.c.l.b16 %v34
  %v103 = vunpack.c.l.b16 %v35
  %v104 = vunpack.c.l.b16 %v36
  %v105 = vunpack.c.l.b16 %v37
  %v106 = vunpack.c.l.b16 %v38
  %v107 = vunpack.c.l.b16 %v39
  %v108 = vunpack.c.l.b16 %v40
  %v109 = vunpack.c.l.b16 %v41
  %v110 = vunpack.c.l.b16 %v42
  %v111 = vunpack.c.l.b16 %v43
  %v112 = vpack.c.b16 %v81, %v80
  %v113 = vpack.c.b16 %v83, %v82
  %v114 = vpack.c.b16 %v85, %v84
  %v115 = vpack.c.b16 %v87, %v86
  %v116 = vpack.c.b16 %v89, %v88
  %v117 = vpack.c.b16 %v91, %v90
  %v118 = vpack.c.b16 %v93, %v92
  %v119 = vpack.c.b16 %v95, %v94
  %v120 = vpack.c.b16 %v97, %v96
  %v121 = vpack.c.b16 %v99, %v98
  %v122 = vpack.c.b16 %v101, %v100
  %v123 = vpack.c.b16 %v103, %v102
  %v124 = vpack.c.b16 %v105, %v104
  %v125 = vpack.c.b16 %v107, %v106
  %v126 = vpack.c.b16 %v109, %v108
  %v127 = vpack.c.b16 %v111, %v110
  %v132 = vunpack.c.l.b16 %v44
  %v133 = vunpack.c.l.b16 %v45
  %v134 = vunpack.c.l.b16 %v46
  %v135 = vunpack.c.l.b16 %v47
  %v136 = vpack.c.b16 %v133, %v132
  %v137 = vpack.c.b16 %v135, %v134
  %vm140 = vcmask 261120
  %v142 = vsel %vm140, %v112, 0
  %v145 = vsel %vm140, %v113, 0
  %v148 = vsel %vm140, %v114, 0
  %v151 = vsel %vm140, %v115, 0
  %v154 = vsel %vm140, %v116, 0
  %v157 = vsel %vm140, %v117, 0
  %v160 = vsel %vm140, %v118, 0
  %v163 = vsel %vm140, %v119, 0
  %v166 = vsel %vm140, %v120, 0
  %v169 = vsel %vm140, %v121, 0
  %v172 = vsel %vm140, %v122, 0
  %v175 = vsel %vm140, %v123, 0
  %v178 = vsel %vm140, %v124, 0
  %v181 = vsel %vm140, %v125, 0
  %v184 = vsel %vm140, %v126, 0
  %v187 = vsel %vm140, %v127, 0
  %189 = vmatprep.subr.bf16.mxu0 0
  %190 = vmatpush1.bf16.msra.mxu0 %v136
  %191 = vmatprep.subr.bf16.mxu0 0
  %192 = vmatpush1.bf16.msra.mxu0 %v137
  %193 = vmatprep.subr.bf16.mxu0 0
  %194 = vmatpush1.bf16.msra.mxu0 0
  %195 = vmatprep.subr.bf16.mxu0 0
  %196 = vmatpush1.bf16.msra.mxu0 0
  %197 = vmatprep.subr.bf16.mxu0 0
  %198 = vmatpush1.bf16.msra.mxu0 0
  %199 = vmatprep.subr.bf16.mxu0 0
  %200 = vmatpush1.bf16.msra.mxu0 0
  %201 = vmatprep.subr.bf16.mxu0 0
  %202 = vmatpush1.bf16.msra.mxu0 0
  %203 = vmatprep.subr.bf16.mxu0 0
  %204 = vmatpush1.bf16.msra.mxu0 0
  %205 = vmatprep.subr.bf16.mxu0 0
  %206 = vmatpush1.bf16.msra.mxu0 0
  %207 = vmatprep.subr.bf16.mxu0 0
  %208 = vmatpush1.bf16.msra.mxu0 0
  %209 = vmatprep.subr.bf16.mxu0 0
  %210 = vmatpush1.bf16.msra.mxu0 0
  %211 = vmatprep.subr.bf16.mxu0 0
  %212 = vmatpush1.bf16.msra.mxu0 0
  %213 = vmatprep.subr.bf16.mxu0 0
  %214 = vmatpush1.bf16.msra.mxu0 0
  %215 = vmatprep.subr.bf16.mxu0 0
  %216 = vmatpush1.bf16.msra.mxu0 0
  %217 = vmatprep.subr.bf16.mxu0 0
  %218 = vmatpush1.bf16.msra.mxu0 0
  %219 = vmatprep.subr.bf16.mxu0 0
  %220 = vmatpush1.bf16.msra.mxu0 0
  %221 = vmatprep.mubr.bf16.mxu0 0
  %222 = vmatmul.mubr.bf16.gmra.mrb[0].mxu0 %v142
  %v223 = vpop.f32.mrb[0].mxu0
  %v224 = vadd.f32 0.0, %v223
  %v225 = vpop.f32.mrb[0].mxu0
  %v226 = vpop.f32.mrb[0].mxu0
  %v227 = vadd.f32 0.0, %v226
  %v228 = vpop.f32.mrb[0].mxu0
  %229 = vmatprep.mubr.bf16.mxu0 0
  %230 = vmatmul.mubr.bf16.gmra.mrb[0].mxu0 %v145
  %v231 = vpop.f32.mrb[0].mxu0
  %v232 = vadd.f32 0.0, %v231
  %v233 = vpop.f32.mrb[0].mxu0
  %v234 = vpop.f32.mrb[0].mxu0
  %v235 = vadd.f32 0.0, %v234
  %v236 = vpop.f32.mrb[0].mxu0
  %237 = vmatprep.mubr.bf16.mxu0 0
  %238 = vmatmul.mubr.bf16.gmra.mrb[0].mxu0 %v148
  %v239 = vpop.f32.mrb[0].mxu0
  %v240 = vadd.f32 0.0, %v239
  %v241 = vpop.f32.mrb[0].mxu0
  %v242 = vpop.f32.mrb[0].mxu0
  %v243 = vadd.f32 0.0, %v242
  %v244 = vpop.f32.mrb[0].mxu0
  %245 = vmatprep.mubr.bf16.mxu0 0
  %246 = vmatmul.mubr.bf16.gmra.mrb[0].mxu0 %v151
  %v247 = vpop.f32.mrb[0].mxu0
  %v248 = vadd.f32 0.0, %v247
  %v249 = vpop.f32.mrb[0].mxu0
  %v250 = vpop.f32.mrb[0].mxu0
  %v251 = vadd.f32 0.0, %v250
  %v252 = vpop.f32.mrb[0].mxu0
  %253 = vmatprep.mubr.bf16.mxu0 0
  %254 = vmatmul.mubr.bf16.gmra.mrb[0].mxu0 %v154
  %v255 = vpop.f32.mrb[0].mxu0
  %v256 = vadd.f32 0.0, %v255
  %v257 = vpop.f32.mrb[0].mxu0
  %v258 = vpop.f32.mrb[0].mxu0
  %v259 = vadd.f32 0.0, %v258
  %v260 = vpop.f32.mrb[0].mxu0
  %261 = vmatprep.mubr.bf16.mxu0 0
  %262 = vmatmul.mubr.bf16.gmra.mrb[0].mxu0 %v157
  %v263 = vpop.f32.mrb[0].mxu0
  %v264 = vadd.f32 0.0, %v263
  %v265 = vpop.f32.mrb[0].mxu0
  %v266 = vpop.f32.mrb[0].mxu0
  %v267 = vadd.f32 0.0, %v266
  %v268 = vpop.f32.mrb[0].mxu0
  %269 = vmatprep.mubr.bf16.mxu0 0
  %270 = vmatmul.mubr.bf16.gmra.mrb[0].mxu0 %v160
  %v271 = vpop.f32.mrb[0].mxu0
  %v272 = vadd.f32 0.0, %v271
  %v273 = vpop.f32.mrb[0].mxu0
  %v274 = vpop.f32.mrb[0].mxu0
  %v275 = vadd.f32 0.0, %v274
  %v276 = vpop.f32.mrb[0].mxu0
  %277 = vmatprep.mubr.bf16.mxu0 0
  %278 = vmatmul.mubr.bf16.gmra.mrb[0].mxu0 %v163
  %v279 = vpop.f32.mrb[0].mxu0
  %v280 = vadd.f32 0.0, %v279
  %v281 = vpop.f32.mrb[0].mxu0
  %v282 = vpop.f32.mrb[0].mxu0
  %v283 = vadd.f32 0.0, %v282
  %v284 = vpop.f32.mrb[0].mxu0
  %285 = vmatprep.mubr.bf16.mxu0 0
  %286 = vmatmul.mubr.bf16.gmra.mrb[0].mxu0 %v166
  %v287 = vpop.f32.mrb[0].mxu0
  %v288 = vadd.f32 0.0, %v287
  %v289 = vpop.f32.mrb[0].mxu0
  %v290 = vpop.f32.mrb[0].mxu0
  %v291 = vadd.f32 0.0, %v290
  %v292 = vpop.f32.mrb[0].mxu0
  %293 = vmatprep.mubr.bf16.mxu0 0
  %294 = vmatmul.mubr.bf16.gmra.mrb[0].mxu0 %v169
  %v295 = vpop.f32.mrb[0].mxu0
  %v296 = vadd.f32 0.0, %v295
  %v297 = vpop.f32.mrb[0].mxu0
  %v298 = vpop.f32.mrb[0].mxu0
  %v299 = vadd.f32 0.0, %v298
  %v300 = vpop.f32.mrb[0].mxu0
  %301 = vmatprep.mubr.bf16.mxu0 0
  %302 = vmatmul.mubr.bf16.gmra.mrb[0].mxu0 %v172
  %v303 = vpop.f32.mrb[0].mxu0
  %v304 = vadd.f32 0.0, %v303
  %v305 = vpop.f32.mrb[0].mxu0
  %v306 = vpop.f32.mrb[0].mxu0
  %v307 = vadd.f32 0.0, %v306
  %v308 = vpop.f32.mrb[0].mxu0
  %309 = vmatprep.mubr.bf16.mxu0 0
  %310 = vmatmul.mubr.bf16.gmra.mrb[0].mxu0 %v175
  %v311 = vpop.f32.mrb[0].mxu0
  %v312 = vadd.f32 0.0, %v311
  %v313 = vpop.f32.mrb[0].mxu0
  %v314 = vpop.f32.mrb[0].mxu0
  %v315 = vadd.f32 0.0, %v314
  %v316 = vpop.f32.mrb[0].mxu0
  %317 = vmatprep.mubr.bf16.mxu0 0
  %318 = vmatmul.mubr.bf16.gmra.mrb[0].mxu0 %v178
  %v319 = vpop.f32.mrb[0].mxu0
  %v320 = vadd.f32 0.0, %v319
  %v321 = vpop.f32.mrb[0].mxu0
  %v322 = vpop.f32.mrb[0].mxu0
  %v323 = vadd.f32 0.0, %v322
  %v324 = vpop.f32.mrb[0].mxu0
  %325 = vmatprep.mubr.bf16.mxu0 0
  %326 = vmatmul.mubr.bf16.gmra.mrb[0].mxu0 %v181
  %v327 = vpop.f32.mrb[0].mxu0
  %v328 = vadd.f32 0.0, %v327
  %v329 = vpop.f32.mrb[0].mxu0
  %v330 = vpop.f32.mrb[0].mxu0
  %v331 = vadd.f32 0.0, %v330
  %v332 = vpop.f32.mrb[0].mxu0
  %333 = vmatprep.mubr.bf16.mxu0 0
  %334 = vmatmul.mubr.bf16.gmra.mrb[0].mxu0 %v184
  %v335 = vpop.f32.mrb[0].mxu0
  %v336 = vadd.f32 0.0, %v335
  %v337 = vpop.f32.mrb[0].mxu0
  %v338 = vpop.f32.mrb[0].mxu0
  %v339 = vadd.f32 0.0, %v338
  %v340 = vpop.f32.mrb[0].mxu0
  %341 = vmatprep.mubr.bf16.mxu0 0
  %342 = vmatmul.mubr.bf16.gmra.mrb[0].mxu0 %v187
  %v343 = vpop.f32.mrb[0].mxu0
  %v344 = vadd.f32 0.0, %v343
  %v345 = vpop.f32.mrb[0].mxu0
  %v346 = vpop.f32.mrb[0].mxu0
  %v347 = vadd.f32 0.0, %v346
  %v348 = vpop.f32.mrb[0].mxu0
  %349 = vdwg.mxu0
  %vm350 = vcmask 7168
  %351 = vst.msk [vmem:[%s2] sm:$0xff] %vm350, %v224
  %352 = vst.msk [vmem:[%s2 + $0x8] sm:$0xff] %vm350, %v227
  %353 = vst.msk [vmem:[%s2 + $0x10] sm:$0xff] %vm350, %v232
  %354 = vst.msk [vmem:[%s2 + $0x18] sm:$0xff] %vm350, %v235
  %355 = vst.msk [vmem:[%s2 + $0x20] sm:$0xff] %vm350, %v240
  %356 = vst.msk [vmem:[%s2 + $0x28] sm:$0xff] %vm350, %v243
  %357 = vst.msk [vmem:[%s2 + $0x30] sm:$0xff] %vm350, %v248
  %358 = vst.msk [vmem:[%s2 + $0x38] sm:$0xff] %vm350, %v251
  %359 = vst.msk [vmem:[%s2 + $0x40] sm:$0xff] %vm350, %v256
  %360 = vst.msk [vmem:[%s2 + $0x48] sm:$0xff] %vm350, %v259
  %361 = vst.msk [vmem:[%s2 + $0x50] sm:$0xff] %vm350, %v264
  %362 = vst.msk [vmem:[%s2 + $0x58] sm:$0xff] %vm350, %v267
  %363 = vst.msk [vmem:[%s2 + $0x60] sm:$0xff] %vm350, %v272
  %364 = vst.msk [vmem:[%s2 + $0x68] sm:$0xff] %vm350, %v275
  %365 = vst.msk [vmem:[%s2 + $0x70] sm:$0xff] %vm350, %v280
  %366 = vst.msk [vmem:[%s2 + $0x78] sm:$0xff] %vm350, %v283
  %367 = vst.msk [vmem:[%s2 + $0x80] sm:$0xff] %vm350, %v288
  %368 = vst.msk [vmem:[%s2 + $0x88] sm:$0xff] %vm350, %v291
  %369 = vst.msk [vmem:[%s2 + $0x90] sm:$0xff] %vm350, %v296
  %370 = vst.msk [vmem:[%s2 + $0x98] sm:$0xff] %vm350, %v299
  %371 = vst.msk [vmem:[%s2 + $0xa0] sm:$0xff] %vm350, %v304
  %372 = vst.msk [vmem:[%s2 + $0xa8] sm:$0xff] %vm350, %v307
  %373 = vst.msk [vmem:[%s2 + $0xb0] sm:$0xff] %vm350, %v312
  %374 = vst.msk [vmem:[%s2 + $0xb8] sm:$0xff] %vm350, %v315
  %375 = vst.msk [vmem:[%s2 + $0xc0] sm:$0xff] %vm350, %v320
  %376 = vst.msk [vmem:[%s2 + $0xc8] sm:$0xff] %vm350, %v323
  %377 = vst.msk [vmem:[%s2 + $0xd0] sm:$0xff] %vm350, %v328
  %378 = vst.msk [vmem:[%s2 + $0xd8] sm:$0xff] %vm350, %v331
  %379 = vst.msk [vmem:[%s2 + $0xe0] sm:$0xff] %vm350, %v336
  %380 = vst.msk [vmem:[%s2 + $0xe8] sm:$0xff] %vm350, %v339
  %381 = vst.msk [vmem:[%s2 + $0xf0] sm:$0xff] %vm350, %v344
  %382 = vst.msk [vmem:[%s2 + $0xf8] sm:$0xff] %vm350, %v347
  // Predicated region
  $region10: #{one_label_forward.2} parent=0 // pred_check
    _
  $region11: #{one_label_forward.2} parent=0 // pred_check_branch
    %384 = sbr.rel (0) target = $region13
  $region12: #{one_label_forward.2} parent=0 // pred_region
    _
  $region13: #{one_label_forward.2} parent=0 // pred_fallthru
    _
  // Predicated region
  $region14: #{one_label_forward.2} parent=0 // pred_check
    _
  $region15: #{one_label_forward.2} parent=0 // pred_check_branch
    %386 = sbr.rel (0) target = $region17
  $region16: #{one_label_forward.2} parent=0 // pred_region
    _
  $region17: #{one_label_forward.2} parent=0 // pred_fallthru
    _

</llo_original>
